<compile_context>
chip_gen: v7x
topology: tpu7x:2x2x1
jax: 0.10.0
libtpu: 0.0.40
codegen_flags: <defaults>
</compile_context>

<pallas_src>
import jax
import jax.numpy as jnp
from jax.experimental import pallas as pl
from jax.experimental.pallas import tpu as pltpu


def _mask_module_kernel(mt_ref, x_ref, out_ref, loss_ref, gram_acc, sq_acc):
    li = pl.program_id(1)
    n_lt = pl.num_programs(1)

    x = x_ref[...].astype(jnp.float32)        # (C, Lt)
    mt = mt_ref[...].astype(jnp.float32)      # (T, C)
    T = mt.shape[0]

    # attn = sigmoid(mask_token @ x_flat) for this L tile          -> (T, Lt)
    attn = jax.nn.sigmoid(
        jnp.dot(mt, x, preferred_element_type=jnp.float32))

    # out = x * sum_t attn   (== (x[:,None] * attn[:, :, None]).sum(1))
    m_sum = jnp.sum(attn, axis=0, keepdims=True)                 # (1, Lt)
    out_ref[...] = (x * m_sum).astype(out_ref.dtype)

    # ---- dice statistics, accumulated across L tiles in VMEM scratch ----
    @pl.when(li == 0)
    def _():
        gram_acc[...] = jnp.zeros_like(gram_acc)
        sq_acc[...] = jnp.zeros_like(sq_acc)

    # gram[i, j] += sum_l attn[i, l] * attn[j, l]                 -> (T, T)
    gram_acc[...] += jax.lax.dot_general(
        attn, attn, (((1,), (1,)), ((), ())),
        preferred_element_type=jnp.float32)
    # sq[i] += sum_l attn[i, l]^2                                 -> (T, 1)
    sq_acc[...] += jnp.sum(attn * attn, axis=-1, keepdims=True)

    # ---- finalize once per batch element (last L tile only) ----
    @pl.when(li == n_lt - 1)
    def _():
        sq = sq_acc[...]                                         # (T, 1)
        denom = sq + sq.T + jnp.float32(2e-12)                   # b + c
        d = 2.0 * gram_acc[...] / denom                          # (T, T)
        ri = jax.lax.broadcasted_iota(jnp.int32, (T, T), 0)
        ci = jax.lax.broadcasted_iota(jnp.int32, (T, T), 1)
        partial = jnp.sum(jnp.where(ri != ci, d, 0.0))           # scalar
        # Lane-dense, written once per n -> single unmasked store.
        loss_ref[...] = jnp.full(loss_ref.shape, partial, dtype=jnp.float32)


def _pick_l_tile(L, C, itemsize, budget_bytes):
    """Largest lane tile that divides L, is a multiple of 128 and keeps one
    (C, lt) slab under `budget_bytes`.  Falls back to the full L extent
    (full-dim blocks are always legal)."""
    max_lt = budget_bytes // max(1, C * itemsize)
    if L <= max_lt or L < 128:
        return L
    lt = (min(max_lt, L) // 128) * 128
    while lt >= 128:
        if L % lt == 0:
            return lt
        lt -= 128
    return L


def mask_module_forward(x, mask_token, *, lane_tile_bytes=4 << 20):
    """x: (N, C, H, W); mask_token: (T, C).
    Returns (out (N, C, H, W) in x.dtype, mask_loss f32 scalar)."""
    N, C, H, W = x.shape
    T = mask_token.shape[0]
    L = H * W
    x_flat = x.reshape(N, C, L)

    lt = _pick_l_tile(L, C, x.dtype.itemsize, lane_tile_bytes)
    num_lt = L // lt if L % lt == 0 else 1
    if L % lt != 0:
        lt = L

    # Pipeline footprint: x + out, each ~2-deep buffered, one (C, lt) slab.
    per_stream = C * lt * x.dtype.itemsize
    vmem_limit = int(min(48 << 20, max(32 << 20, 6 * per_stream)))

    out_flat, partials = pl.pallas_call(
        _mask_module_kernel,
        out_shape=(
            jax.ShapeDtypeStruct((N, C, L), x.dtype),
            jax.ShapeDtypeStruct((N, 8, 128), jnp.float32),   # per-n partials
        ),
        grid_spec=pltpu.PrefetchScalarGridSpec(
            num_scalar_prefetch=0,
            grid=(N, num_lt),
            in_specs=[
                # mask_token table: resident (constant block index).
                pl.BlockSpec((T, C), lambda n, l: (0, 0)),
                # x slab for this (n, L-tile); batch dim squeezed.
                pl.BlockSpec((pl.Squeezed(), C, lt), lambda n, l: (n, 0, l)),
            ],
            out_specs=(
                pl.BlockSpec((pl.Squeezed(), C, lt), lambda n, l: (n, 0, l)),
                # Per-batch partial loss, resident across the L axis.
                pl.BlockSpec((pl.Squeezed(), 8, 128), lambda n, l: (n, 0, 0)),
            ),
            scratch_shapes=[
                pltpu.VMEM((T, T), jnp.float32),   # gram accumulator
                pltpu.VMEM((T, 1), jnp.float32),   # sq accumulator
            ],
        ),
        compiler_params=pltpu.CompilerParams(
            dimension_semantics=("parallel", "arbitrary"),
            vmem_limit_bytes=vmem_limit,
        ),
    )(mask_token, x_flat)

    # Final reduction + mask.sum() normalization in plain JAX.
    mask_loss = jnp.sum(partials[:, 0, 0]) / jnp.float32(N * T * (T - 1))
    return out_flat.reshape(N, C, H, W), mask_loss


def _reference_forward(x, mask_token):
    # Plain-JAX reference mirroring the PyTorch module exactly.
    N, C, H, W = x.shape
    k = x.reshape(N, C, H * W)
    attn = jax.nn.sigmoid(jnp.einsum("tc,ncl->ntl", mask_token, k))
    out = (x[:, None, :, :, :] * attn.reshape(N, -1, 1, H, W)).sum(1)
    inputs = attn  # (N, T, L)
    a = jnp.einsum("nil,njl->nij", inputs, inputs)
    sq = jnp.sum(inputs * inputs, axis=-1)
    b = sq[:, None, :] + 1e-12
    c = sq[:, :, None] + 1e-12
    d = 2 * a / (b + c)
    T = inputs.shape[1]
    m = 1.0 - jnp.eye(T)[None]
    m = jnp.broadcast_to(m, d.shape)
    loss = (d * m).sum() / m.sum()
    return out, loss


if __name__ == "__main__":
    key = jax.random.PRNGKey(0)
    k_x, k_tok = jax.random.split(key)

    N, C, H, W = 2, 4, 16, 16
    T = 8  # num_tokens

    x = jax.random.normal(k_x, (N, C, H, W), dtype=jnp.float32)
    # nn.Parameter(torch.randn(T, C).normal_(0, 0.01)) -> N(0, 0.01)
    mask_token = 0.01 * jax.random.normal(k_tok, (T, C), dtype=jnp.float32)

    out, loss = mask_module_forward(x, mask_token)
    jax.block_until_ready((out, loss))

    out_ref, loss_ref = _reference_forward(x, mask_token)
    assert jnp.allclose(out, out_ref, atol=1e-5, rtol=1e-5)
    assert jnp.allclose(loss, loss_ref, atol=1e-5, rtol=1e-5)

    print("KERNEL_OK")
</pallas_src>

<mosaic_0001>
module attributes {stable_mosaic.version = 11 : i64} {
  func.func @_mask_module_kernel(%arg0: i32, %arg1: i32, %arg2: memref<8x4xf32, #tpu.memory_space<vmem>>, %arg3: memref<1x4x256xf32, #tpu.memory_space<vmem>>, %arg4: memref<1x4x256xf32, #tpu.memory_space<vmem>>, %arg5: memref<1x8x128xf32, #tpu.memory_space<vmem>>, %arg6: memref<8x8xf32, #tpu.memory_space<vmem>>, %arg7: memref<8x1xf32, #tpu.memory_space<vmem>>) attributes {dimension_semantics = [#tpu.dimension_semantics<parallel>, #tpu.dimension_semantics<arbitrary>], iteration_bounds = array<i64: 2, 1>, scalar_prefetch = 0 : i64, scratch_operands = 2 : i64, tpu.core_type = #tpu.core_type<tc>, window_params = [{pipeline_mode = #tpu.pipeline_mode<synchronous>, transform_indices = @transform_0, window_bounds = array<i64: 8, 4>}, {transform_indices = @transform_1, window_bounds = array<i64: 1, 4, 256>}, {transform_indices = @transform_2, window_bounds = array<i64: 1, 4, 256>}, {transform_indices = @transform_3, window_bounds = array<i64: 1, 8, 128>}]} {
    %c0 = arith.constant 0 : index
    %c0_0 = arith.constant 0 : index
    %c0_1 = arith.constant 0 : index
    %0 = vector.load %arg3[%c0, %c0_0, %c0_1] : memref<1x4x256xf32, #tpu.memory_space<vmem>>, vector<1x4x256xf32>
    %1 = vector.shape_cast %0 : vector<1x4x256xf32> to vector<4x256xf32>
    %c0_2 = arith.constant 0 : index
    %c0_3 = arith.constant 0 : index
    %2 = vector.load %arg2[%c0_2, %c0_3] : memref<8x4xf32, #tpu.memory_space<vmem>>, vector<8x4xf32>
    %cst = arith.constant dense<0.000000e+00> : vector<8x256xf32>
    %3 = tpu.matmul %2, %1, %cst {dimension_numbers = #tpu.dot_dimension_numbers<[1], [0], [0], [1], [0, 0, 1, 1], [], []>} : vector<8x4xf32>, vector<4x256xf32>, vector<8x256xf32> -> vector<8x256xf32>
    %4 = arith.negf %3 : vector<8x256xf32>
    %5 = math.exp %4 : vector<8x256xf32>
    %cst_4 = arith.constant 1.000000e+00 : f32
    %6 = vector.broadcast %cst_4 : f32 to vector<8x256xf32>
    %7 = arith.addf %6, %5 : vector<8x256xf32>
    %8 = arith.divf %6, %7 : vector<8x256xf32>
    %cst_5 = arith.constant dense<0.000000e+00> : vector<256xf32>
    %9 = vector.multi_reduction <add>, %8, %cst_5 [0] : vector<8x256xf32> to vector<256xf32>
    %10 = vector.shape_cast %9 : vector<256xf32> to vector<1x256xf32>
    %11 = vector.broadcast %10 : vector<1x256xf32> to vector<4x256xf32>
    %12 = arith.mulf %1, %11 : vector<4x256xf32>
    %c0_6 = arith.constant 0 : index
    %c0_7 = arith.constant 0 : index
    %c0_8 = arith.constant 0 : index
    %13 = vector.load %arg4[%c0_6, %c0_7, %c0_8] : memref<1x4x256xf32, #tpu.memory_space<vmem>>, vector<1x4x256xf32>
    %14 = vector.shape_cast %13 : vector<1x4x256xf32> to vector<4x256xf32>
    %15 = vector.shape_cast %12 : vector<4x256xf32> to vector<1x4x256xf32>
    tpu.vector_store %arg4[%c0_6, %c0_7, %c0_8], %15 {strides = array<i32>} : memref<1x4x256xf32, #tpu.memory_space<vmem>>, vector<1x4x256xf32>,
    %c0_i32 = arith.constant 0 : i32
    %16 = arith.cmpi eq, %arg1, %c0_i32 : i32
    %17 = arith.extui %16 : i1 to i32
    %c0_i32_9 = arith.constant 0 : i32
    %18 = arith.cmpi ne, %17, %c0_i32_9 : i32
    scf.if %18 {
      %cst_22 = arith.constant 0.000000e+00 : f32
      %32 = vector.broadcast %cst_22 : f32 to vector<8x8xf32>
      %c0_23 = arith.constant 0 : index
      %c0_24 = arith.constant 0 : index
      %33 = vector.load %arg6[%c0_23, %c0_24] : memref<8x8xf32, #tpu.memory_space<vmem>>, vector<8x8xf32>
      tpu.vector_store %arg6[%c0_23, %c0_24], %32 {strides = array<i32>} : memref<8x8xf32, #tpu.memory_space<vmem>>, vector<8x8xf32>,
      %cst_25 = arith.constant 0.000000e+00 : f32
      %34 = vector.broadcast %cst_25 : f32 to vector<8x1xf32>
      %c0_26 = arith.constant 0 : index
      %c0_27 = arith.constant 0 : index
      %35 = vector.load %arg7[%c0_26, %c0_27] : memref<8x1xf32, #tpu.memory_space<vmem>>, vector<8x1xf32>
      tpu.vector_store %arg7[%c0_26, %c0_27], %34 {strides = array<i32>} : memref<8x1xf32, #tpu.memory_space<vmem>>, vector<8x1xf32>,
    } else {
    }
    %c0_10 = arith.constant 0 : index
    %c0_11 = arith.constant 0 : index
    %19 = vector.load %arg6[%c0_10, %c0_11] : memref<8x8xf32, #tpu.memory_space<vmem>>, vector<8x8xf32>
    %cst_12 = arith.constant dense<0.000000e+00> : vector<8x8xf32>
    %20 = tpu.matmul %8, %8, %cst_12 {dimension_numbers = #tpu.dot_dimension_numbers<[1], [1], [0], [0], [0, 0, 1, 0], [], []>} : vector<8x256xf32>, vector<8x256xf32>, vector<8x8xf32> -> vector<8x8xf32>
    %21 = arith.addf %19, %20 : vector<8x8xf32>
    %c0_13 = arith.constant 0 : index
    %c0_14 = arith.constant 0 : index
    %22 = vector.load %arg6[%c0_13, %c0_14] : memref<8x8xf32, #tpu.memory_space<vmem>>, vector<8x8xf32>
    tpu.vector_store %arg6[%c0_13, %c0_14], %21 {strides = array<i32>} : memref<8x8xf32, #tpu.memory_space<vmem>>, vector<8x8xf32>,
    %c0_15 = arith.constant 0 : index
    %c0_16 = arith.constant 0 : index
    %23 = vector.load %arg7[%c0_15, %c0_16] : memref<8x1xf32, #tpu.memory_space<vmem>>, vector<8x1xf32>
    %24 = arith.mulf %8, %8 : vector<8x256xf32>
    %cst_17 = arith.constant dense<0.000000e+00> : vector<8xf32>
    %25 = vector.multi_reduction <add>, %24, %cst_17 [1] : vector<8x256xf32> to vector<8xf32>
    %26 = vector.shape_cast %25 : vector<8xf32> to vector<8x1xf32>
    %27 = arith.addf %23, %26 : vector<8x1xf32>
    %c0_18 = arith.constant 0 : index
    %c0_19 = arith.constant 0 : index
    %28 = vector.load %arg7[%c0_18, %c0_19] : memref<8x1xf32, #tpu.memory_space<vmem>>, vector<8x1xf32>
    tpu.vector_store %arg7[%c0_18, %c0_19], %27 {strides = array<i32>} : memref<8x1xf32, #tpu.memory_space<vmem>>, vector<8x1xf32>,
    %c0_i32_20 = arith.constant 0 : i32
    %29 = arith.cmpi eq, %arg1, %c0_i32_20 : i32
    %30 = arith.extui %29 : i1 to i32
    %c0_i32_21 = arith.constant 0 : i32
    %31 = arith.cmpi ne, %30, %c0_i32_21 : i32
    scf.if %31 {
      %c0_22 = arith.constant 0 : index
      %c0_23 = arith.constant 0 : index
      %32 = vector.load %arg7[%c0_22, %c0_23] : memref<8x1xf32, #tpu.memory_space<vmem>>, vector<8x1xf32>
      %33 = tpu.transpose %32, [1, 0] : vector<8x1xf32> -> vector<1x8xf32>
      %34 = vector.broadcast %32 : vector<8x1xf32> to vector<8x8xf32>
      %35 = vector.broadcast %33 : vector<1x8xf32> to vector<8x8xf32>
      %36 = arith.addf %34, %35 : vector<8x8xf32>
      %cst_24 = arith.constant 2.000000e-12 : f32
      %37 = vector.broadcast %cst_24 : f32 to vector<8x8xf32>
      %38 = arith.addf %36, %37 : vector<8x8xf32>
      %c0_25 = arith.constant 0 : index
      %c0_26 = arith.constant 0 : index
      %39 = vector.load %arg6[%c0_25, %c0_26] : memref<8x8xf32, #tpu.memory_space<vmem>>, vector<8x8xf32>
      %cst_27 = arith.constant 2.000000e+00 : f32
      %40 = vector.broadcast %cst_27 : f32 to vector<8x8xf32>
      %41 = arith.mulf %40, %39 : vector<8x8xf32>
      %42 = arith.divf %41, %38 : vector<8x8xf32>
      %43 = tpu.iota {dimensions = array<i32: 0>} : vector<8x8xi32>
      %44 = tpu.iota {dimensions = array<i32: 1>} : vector<8x8xi32>
      %45 = arith.cmpi ne, %43, %44 : vector<8x8xi32>
      %cst_28 = arith.constant 0.000000e+00 : f32
      %46 = vector.broadcast %cst_28 : f32 to vector<8x8xf32>
      %47 = arith.select %45, %42, %46 : vector<8x8xi1>, vector<8x8xf32>
      %48 = vector.shape_cast %47 : vector<8x8xf32> to vector<1x8x8xf32>
      %cst_29 = arith.constant dense<0.000000e+00> : vector<1xf32>
      %49 = vector.multi_reduction <add>, %48, %cst_29 [1, 2] : vector<1x8x8xf32> to vector<1xf32>
      %50 = vector.shape_cast %49 : vector<1xf32> to vector<1x1x1xf32>
      %51 = vector.extract %50[0, 0, 0] : f32 from vector<1x1x1xf32>
      %52 = vector.broadcast %51 : f32 to vector<8x128xf32>
      %c0_30 = arith.constant 0 : index
      %c0_31 = arith.constant 0 : index
      %c0_32 = arith.constant 0 : index
      %53 = vector.load %arg5[%c0_30, %c0_31, %c0_32] : memref<1x8x128xf32, #tpu.memory_space<vmem>>, vector<1x8x128xf32>
      %54 = vector.shape_cast %53 : vector<1x8x128xf32> to vector<8x128xf32>
      %55 = vector.shape_cast %52 : vector<8x128xf32> to vector<1x8x128xf32>
      tpu.vector_store %arg5[%c0_30, %c0_31, %c0_32], %55 {strides = array<i32>} : memref<1x8x128xf32, #tpu.memory_space<vmem>>, vector<1x8x128xf32>,
    } else {
    }
    return
  }
  func.func @transform_0(%arg0: i32, %arg1: i32) -> (i32, i32) {
    %c0_i32 = arith.constant 0 : i32
    %c0_i32_0 = arith.constant 0 : i32
    %c0_i32_1 = arith.constant 0 : i32
    return %c0_i32, %c0_i32_0 : i32, i32
  }
  func.func @transform_1(%arg0: i32, %arg1: i32) -> (i32, i32, i32) {
    %c0_i32 = arith.constant 0 : i32
    %c0_i32_0 = arith.constant 0 : i32
    return %arg0, %c0_i32, %arg1 : i32, i32, i32
  }
  func.func @transform_2(%arg0: i32, %arg1: i32) -> (i32, i32, i32) {
    %c0_i32 = arith.constant 0 : i32
    %c0_i32_0 = arith.constant 0 : i32
    return %arg0, %c0_i32, %arg1 : i32, i32, i32
  }
  func.func @transform_3(%arg0: i32, %arg1: i32) -> (i32, i32, i32) {
    %c0_i32 = arith.constant 0 : i32
    %c0_i32_0 = arith.constant 0 : i32
    %c0_i32_1 = arith.constant 0 : i32
    return %arg0, %c0_i32, %c0_i32_0 : i32, i32, i32
  }
}

</mosaic_0001>

<llo_original>
// kernel: tpu_custom_call.1
$region0: #{tpu_custom_call.1}
  #allocation0 [shape = 'u32[]', space=smem, size = 0x4, offset = 0x4, fixed_abs, tag = 'smem constant byte address 0x4 - core index']
  #allocation1 [shape = 'u32[144,128]{1,0:T(1,128)}', space=vmem, size = 0x12000, scoped, tag = 'internal scratch']
  #allocation2 [shape = 'f32[8,8]{1,0:T(8,128)}', space=vmem, size = 0x1000, scoped, tag = 'scratch operand']
  #allocation3 [shape = 'f32[8,1]{1,0:T(8,128)}', space=vmem, size = 0x1000, scoped, tag = 'scratch operand']
  %s0 = inlined_call_operand.vmem [shape: f32[8,4], index: 0, kind: input, shape index: {}]
  %s1 = inlined_call_operand.hbm [shape: f32[2,4,256], index: 1, kind: input, shape index: {}]
  %s2 = inlined_call_operand.hbm [shape: f32[2,4,256], index: 2, kind: output, shape index: {0}]
  %s3 = inlined_call_operand.hbm [shape: f32[2,8,128], index: 3, kind: output, shape index: {1}]
  %4 = xla_tuple %s2, %s3
  %s5 = sld [smem:[#allocation0]]
  $region61: #{tpu_custom_call.1} parent=0
    _
  %s7 = ssub.s32 1, %s5
  %s8 = scalar_select 0, %s7, %s5
  $region1: #{tpu_custom_call.1} parent=0
    #allocation4 [shape = 'u8[8192]{0}', space=vmem, size = 0x2000, scoped, tag = 'input window, operand 1']
    #allocation5 [shape = 's32[2]{0}', space=sflag, size = 0x8, scoped, tag = 'scoped memory for tpu_custom_call.1']
    #allocation6 [shape = 's32[2]{0}', space=sflag, size = 0x8, scoped, tag = 'scoped memory for tpu_custom_call.1']
    #allocation7 [shape = 'u8[8192]{0}', space=vmem, size = 0x2000, scoped, tag = 'output window, operand 0']
    #allocation8 [shape = 'u8[8192]{0}', space=vmem, size = 0x2000, scoped, tag = 'output window, operand 1']
    #allocation9 [shape = 's32[2]{0}', space=sflag, size = 0x8, scoped, tag = 'scoped memory for tpu_custom_call.1']
    %9 = vsyncpa [#allocation5], 0
    %s10 = scalar_lea.sflag [#allocation5], 1
    %11 = vsyncpa %s10, 0
    %12 = vsyncpa [#allocation6], 0
    %s13 = scalar_lea.sflag [#allocation6], 1
    %14 = vsyncpa %s13, 0
    %15 = vsyncpa [#allocation9], 0
    %s16 = scalar_lea.sflag [#allocation9], 1
    %17 = vsyncpa %s16, 0
    loop: start=0, step=1, limit=4
    $region2: #{tpu_custom_call.1} parent=1 // loop_pre_header
      _
    $region3: #{tpu_custom_call.1} parent=1 // loop_header
      %s19 = sphi 0, %s23
      %p20 = scmp.ge.s32.totalorder %s19, 4
      %s26 = sphi 0, %s38
      %s27 = sphi 0, %s34
      %s28 = sphi 0, %s26
      %s29 = sphi 0, %s27
      %s30 = sphi 0, %s28
      %s31 = sphi 0, %s29
      %s39 = sphi 0, %s39
      %s41 = sphi 0, %s39
      %s42 = sphi 0, %s41
      %s56 = sphi 0, %s42
      %s64 = sphi 0, %s66
      %s67 = sphi 0, %s64
      %s68 = sphi 0, %s67
      %s84 = sphi 0, %s68
      %s92 = sphi 0, %s94
      %s95 = sphi 0, %s92
      %s96 = sphi 0, %s95
      %s112 = sphi 0, %s96
      %s118 = sphi 0, %s120
      %s121 = sphi 0, %s118
      %s122 = sphi 0, %s121
      %s138 = sphi 0, %s122
    $region4: #{tpu_custom_call.1} parent=1 // loop_header_branch
      %22 = sbr.rel (%p20) target = $region8
    $region5: #{tpu_custom_call.1} parent=1 // loop_body
      %s24 = ssub.s32 %s19, 1
      %s25 = ssub.s32 %s19, 2
      %s32 = sadd.s32 1, %s27
      %p33 = scmp.ge.s32.totalorder %s32, 1
      %s34 = scalar_select %p33, 0, %s32
      %s35 = sadd.s32 1, %s26
      %s36 = scalar_select %p33, %s35, %s26
      %p37 = scmp.ge.s32.totalorder %s36, 2
      %s38 = scalar_select %p37, 0, %s36
      %s40 = sadd.s32 %s39, 1
      %p43 = scmp.eq.s32.totalorder %s19, 1
      %p44 = scmp.ne.s32.totalorder %s39, %s41
      %p45 = scmp.eq.s32.totalorder %s19, 0
      %p46 = por %p44, %p45
      %p47 = scmp.ne.s32.totalorder %s39, %s41
      %p48 = scmp.eq.s32.totalorder %s24, 1
      %p49 = por %p47, %p48
      %p50 = scmp.ne.s32.totalorder %s41, %s42
      %p51 = scmp.eq.s32.totalorder %s24, 0
      %p52 = por %p50, %p51
      %p53 = scmp.ne.s32.totalorder %s41, %s42
      %p54 = scmp.eq.s32.totalorder %s25, 1
      %p55 = por %p53, %p54
      %p57 = scmp.ne.s32.totalorder %s42, %s56
      %p58 = scmp.eq.s32.totalorder %s25, 0
      %p59 = por %p57, %p58
      %s60 = ssub.s32 %s26, %s38
      %s61 = ssub.s32 %s27, %s34
      %s62 = sor.u32 %s60, %s61
      %p63 = scmp.eq.s32.totalorder %s62, 0
      %s65 = sadd.s32 %s64, 1
      %s66 = scalar_select %p63, %s64, %s65
      %p69 = pneg %p63
      %p70 = scmp.eq.s32.totalorder %s19, 1
      %p71 = por %p69, %p70
      %p72 = scmp.ne.s32.totalorder %s64, %s67
      %p73 = scmp.eq.s32.totalorder %s19, 0
      %p74 = por %p72, %p73
      %p75 = scmp.ne.s32.totalorder %s64, %s67
      %p76 = scmp.eq.s32.totalorder %s24, 1
      %p77 = por %p75, %p76
      %p78 = scmp.ne.s32.totalorder %s67, %s68
      %p79 = scmp.eq.s32.totalorder %s24, 0
      %p80 = por %p78, %p79
      %p81 = scmp.ne.s32.totalorder %s67, %s68
      %p82 = scmp.eq.s32.totalorder %s25, 1
      %p83 = por %p81, %p82
      %p85 = scmp.ne.s32.totalorder %s68, %s84
      %p86 = scmp.eq.s32.totalorder %s25, 0
      %p87 = por %p85, %p86
      %s88 = ssub.s32 %s26, %s38
      %s89 = ssub.s32 %s27, %s34
      %s90 = sor.u32 %s88, %s89
      %p91 = scmp.eq.s32.totalorder %s90, 0
      %s93 = sadd.s32 %s92, 1
      %s94 = scalar_select %p91, %s92, %s93
      %p97 = pneg %p91
      %p98 = scmp.eq.s32.totalorder %s19, 1
      %p99 = por %p97, %p98
      %p100 = scmp.ne.s32.totalorder %s92, %s95
      %p101 = scmp.eq.s32.totalorder %s19, 0
      %p102 = por %p100, %p101
      %p103 = scmp.ne.s32.totalorder %s92, %s95
      %p104 = scmp.eq.s32.totalorder %s24, 1
      %p105 = por %p103, %p104
      %p106 = scmp.ne.s32.totalorder %s95, %s96
      %p107 = scmp.eq.s32.totalorder %s24, 0
      %p108 = por %p106, %p107
      %p109 = scmp.ne.s32.totalorder %s95, %s96
      %p110 = scmp.eq.s32.totalorder %s25, 1
      %p111 = por %p109, %p110
      %p113 = scmp.ne.s32.totalorder %s96, %s112
      %p114 = scmp.eq.s32.totalorder %s25, 0
      %p115 = por %p113, %p114
      %s116 = ssub.s32 %s26, %s38
      %p117 = scmp.eq.s32.totalorder %s116, 0
      %s119 = sadd.s32 %s118, 1
      %s120 = scalar_select %p117, %s118, %s119
      %p123 = pneg %p117
      %p124 = scmp.eq.s32.totalorder %s19, 1
      %p125 = por %p123, %p124
      %p126 = scmp.ne.s32.totalorder %s118, %s121
      %p127 = scmp.eq.s32.totalorder %s19, 0
      %p128 = por %p126, %p127
      %p129 = scmp.ne.s32.totalorder %s118, %s121
      %p130 = scmp.eq.s32.totalorder %s24, 1
      %p131 = por %p129, %p130
      %p132 = scmp.ne.s32.totalorder %s121, %s122
      %p133 = scmp.eq.s32.totalorder %s24, 0
      %p134 = por %p132, %p133
      %p135 = scmp.ne.s32.totalorder %s121, %s122
      %p136 = scmp.eq.s32.totalorder %s25, 1
      %p137 = por %p135, %p136
      %p139 = scmp.ne.s32.totalorder %s122, %s138
      %p140 = scmp.eq.s32.totalorder %s25, 0
      %p141 = por %p139, %p140
      %p142 = scmp.le.s32.totalorder 1, %s19
      %p143 = scmp.lt.s32.totalorder %s19, 3
      %p144 = pnand %p142, %p143
      %p145 = pneg %p144
      // Predicated region
      $region9: #{tpu_custom_call.1} parent=5 // pred_check
        _
      $region10: #{tpu_custom_call.1} parent=5 // pred_check_branch
        %147 = sbr.rel (%p144) target = $region12
      $region11: #{tpu_custom_call.1} parent=5 // pred_region
        %s148 = ssub.s32 %s19, 1
        // Predicated region
        $region13: #{tpu_custom_call.1} parent=11 // pred_check
          %p149 = pneg %p52
        $region14: #{tpu_custom_call.1} parent=11 // pred_check_branch
          %151 = sbr.rel (%p149) target = $region16
        $region15: #{tpu_custom_call.1} parent=11 // pred_region
          _
        $region16: #{tpu_custom_call.1} parent=11 // pred_fallthru
          _
      $region12: #{tpu_custom_call.1} parent=5 // pred_fallthru
        _
      %p152 = scmp.lt.s32.totalorder %s19, 2
      // Predicated region
      $region17: #{tpu_custom_call.1} parent=5 // pred_check
        %p153 = pneg %p152
      $region18: #{tpu_custom_call.1} parent=5 // pred_check_branch
        %155 = sbr.rel (%p153) target = $region20
      $region19: #{tpu_custom_call.1} parent=5 // pred_region
        // Predicated region
        $region21: #{tpu_custom_call.1} parent=19 // pred_check
          %p156 = pneg %p74
        $region22: #{tpu_custom_call.1} parent=19 // pred_check_branch
          %158 = sbr.rel (%p156) target = $region24
        $region23: #{tpu_custom_call.1} parent=19 // pred_region
          %s159 = sand.u32 %s64, 1
          %s160 = scalar_lea.sflag [#allocation5], %s159
          %s161 = sand.u32 %s64, 1
          %s162 = smul.addr %s161, 8
          %s163 = scalar_lea.vmem [#allocation4], %s162
          %s164 = smul.u32 2, %s27
          %s166 = ssub.s32 128, 128
          %167 = vsyncadd %s160, %s166
          %s168 = smul.addr %s26, 2
          %s169 = sadd.s32 %s164, %s168
          %s170 = smul.addr %s169, 64
          %s171 = scalar_lea.hbm %s1, %s170
          %s173 = sshll.u32 %s163, 4
          %s174 = int_to_ptr.vmem [resolvable:$true] %s173
          %176 = dma.hbm_to_vmem [thread:$0]  %s171, 128, %s174, %s160
        $region24: #{tpu_custom_call.1} parent=19 // pred_fallthru
          _
      $region20: #{tpu_custom_call.1} parent=5 // pred_fallthru
        _
      %p177 = scmp.le.s32.totalorder 1, %s19
      %p178 = scmp.lt.s32.totalorder %s19, 3
      %p179 = pnand %p177, %p178
      %p180 = pneg %p179
      // Predicated region
      $region25: #{tpu_custom_call.1} parent=5 // pred_check
        _
      $region26: #{tpu_custom_call.1} parent=5 // pred_check_branch
        %182 = sbr.rel (%p179) target = $region28
      $region27: #{tpu_custom_call.1} parent=5 // pred_region
        %s183 = ssub.s32 %s19, 1
        %s184 = sand.u32 %s67, 1
        %s185 = scalar_lea.sflag [#allocation5], %s184
        %s186 = sand.u32 %s67, 1
        %s187 = smul.addr %s186, 8
        %s188 = scalar_lea.vmem [#allocation4], %s187
        // Predicated region
        $region29: #{tpu_custom_call.1} parent=27 // pred_check
          %p189 = pneg %p80
        $region30: #{tpu_custom_call.1} parent=27 // pred_check_branch
          %191 = sbr.rel (%p189) target = $region32
        $region31: #{tpu_custom_call.1} parent=27 // pred_region
          %192 = dma.done %s185, 128
        $region32: #{tpu_custom_call.1} parent=27 // pred_fallthru
          _
        %p193 = pneg %p52
        %p194 = pneg %p49
        %s195 = sand.u32 %s67, 1
        %s196 = scalar_lea.sflag [#allocation5], %s195
        %s197 = sand.u32 %s67, 1
        %s198 = smul.addr %s197, 8
        %s199 = scalar_lea.vmem [#allocation4], %s198
        %p200 = pneg %p80
        %p201 = pneg %p77
        %p202 = pneg %p108
        %p203 = pneg %p105
        %s204 = sand.u32 %s95, 1
        %s205 = scalar_lea.sflag [#allocation6], %s204
        %s206 = sand.u32 %s95, 1
        %s207 = smul.addr %s206, 8
        %s208 = scalar_lea.vmem [#allocation7], %s207
        %p209 = pneg %p134
        %p210 = pneg %p131
        %s211 = sand.u32 %s121, 1
        %s212 = scalar_lea.sflag [#allocation9], %s211
        %s213 = sand.u32 %s121, 1
        %s214 = smul.addr %s213, 8
        %s215 = scalar_lea.vmem [#allocation8], %s214
        %s216 = smul.u32 2, %s29
        %s217 = smul.u32 2, %s29
        %v218 = vld [vmem:[%s188] sm:$0xff]
        %v219 = vld [vmem:[%s0] sm:$0xff]
        %v221 = vcombine.high %v218, %v218
        %vm222 = vcmask 31744
        %v224 = vsel %vm222, %v219, 0
        %vm226 = vcmask 1043456
        %v227 = vsel %vm226, %v218, 0
        %v229 = vsel %vm226, %v221, 0
        %231 = vmatprep.subr.mxu0 %v229
        %232 = vmatpush1.msra.mxu0 %v227
        %233 = vmatprep.subr.mxu0 0.0
        %234 = vmatpush1.msra.mxu0 0.0
        %235 = vmatprep.subr.mxu0 0.0
        %236 = vmatpush1.msra.mxu0 0.0
        %237 = vmatprep.subr.mxu0 0.0
        %238 = vmatpush1.msra.mxu0 0.0
        %239 = vmatprep.subr.mxu0 0.0
        %240 = vmatpush1.msra.mxu0 0.0
        %241 = vmatprep.subr.mxu0 0.0
        %242 = vmatpush1.msra.mxu0 0.0
        %243 = vmatprep.subr.mxu0 0.0
        %244 = vmatpush1.msra.mxu0 0.0
        %245 = vmatprep.subr.mxu0 0.0
        %246 = vmatpush1.msra.mxu0 0.0
        %247 = vmatprep.subr.mxu0 0.0
        %248 = vmatpush1.msra.mxu0 0.0
        %249 = vmatprep.subr.mxu0 0.0
        %250 = vmatpush1.msra.mxu0 0.0
        %251 = vmatprep.subr.mxu0 0.0
        %252 = vmatpush1.msra.mxu0 0.0
        %253 = vmatprep.subr.mxu0 0.0
        %254 = vmatpush1.msra.mxu0 0.0
        %255 = vmatprep.subr.mxu0 0.0
        %256 = vmatpush1.msra.mxu0 0.0
        %257 = vmatprep.subr.mxu0 0.0
        %258 = vmatpush1.msra.mxu0 0.0
        %259 = vmatprep.subr.mxu0 0.0
        %260 = vmatpush1.msra.mxu0 0.0
        %261 = vmatprep.subr.mxu0 0.0
        %262 = vmatpush1.msra.mxu0 0.0
        %263 = vmatprep.subr.mxu0 0.0
        %264 = vmatpush1.msra.mxu0 0.0
        %265 = vmatprep.subr.mxu0 0.0
        %266 = vmatpush1.msra.mxu0 0.0
        %267 = vmatprep.subr.mxu0 0.0
        %268 = vmatpush1.msra.mxu0 0.0
        %269 = vmatprep.subr.mxu0 0.0
        %270 = vmatpush1.msra.mxu0 0.0
        %271 = vmatprep.subr.mxu0 0.0
        %272 = vmatpush1.msra.mxu0 0.0
        %273 = vmatprep.subr.mxu0 0.0
        %274 = vmatpush1.msra.mxu0 0.0
        %275 = vmatprep.subr.mxu0 0.0
        %276 = vmatpush1.msra.mxu0 0.0
        %277 = vmatprep.subr.mxu0 0.0
        %278 = vmatpush1.msra.mxu0 0.0
        %279 = vmatprep.subr.mxu0 0.0
        %280 = vmatpush1.msra.mxu0 0.0
        %281 = vmatprep.subr.mxu0 0.0
        %282 = vmatpush1.msra.mxu0 0.0
        %283 = vmatprep.subr.mxu0 0.0
        %284 = vmatpush1.msra.mxu0 0.0
        %285 = vmatprep.subr.mxu0 0.0
        %286 = vmatpush1.msra.mxu0 0.0
        %287 = vmatprep.subr.mxu0 0.0
        %288 = vmatpush1.msra.mxu0 0.0
        %289 = vmatprep.subr.mxu0 0.0
        %290 = vmatpush1.msra.mxu0 0.0
        %291 = vmatprep.subr.mxu0 0.0
        %292 = vmatpush1.msra.mxu0 0.0
        %293 = vmatprep.subr.mxu0 0.0
        %294 = vmatpush1.msra.mxu0 0.0
        %295 = vmatprep.mubr.f32.mxu0 0.0
        %296 = vmatmul.mubr.f32.gmra.mrb[0].mxu0 %v224
        %v297 = vpop.f32.mrb[0].mxu0
        %v298 = vadd.f32 0.0, %v297
        %v299 = vpop.f32.mrb[0].mxu0
        %v300 = vadd.f32 0.0, %v299
        %301 = vdwg.mxu0
        %v302 = vxor.u32 %v298, 2147483648
        %v303 = vxor.u32 %v300, 2147483648
        %v304 = vmul.f32 %v302, 1.442695
        %v305 = vpow.pop %v304
        %v306 = vmul.f32 %v303, 1.442695
        %v307 = vpow.pop %v306
        %v308 = vadd.f32 %v305, 1.0
        %v309 = vadd.f32 %v307, 1.0
        %v310 = vrcp.pop %v308
        %v311 = vmul.f32 1.0, %v310
        %v312 = vrcp.pop %v309
        %v313 = vmul.f32 1.0, %v312
        %v314 = vrot.slane %v311, 4
        %v315 = vadd.f32 %v311, %v314
        %v316 = vrot.slane %v315, 2
        %v317 = vadd.f32 %v315, %v316
        %v318 = vrot.slane %v317, 1
        %v319 = vadd.f32 %v317, %v318
        %v320 = vrot.slane %v313, 4
        %v321 = vadd.f32 %v313, %v320
        %v322 = vrot.slane %v321, 2
        %v323 = vadd.f32 %v321, %v322
        %v324 = vrot.slane %v323, 1
        %v325 = vadd.f32 %v323, %v324
        %v328 = vcombine.low %v319, %v325
        %v330 = vmul.f32 %v218, %v328
        %331 = vst [vmem:[%s208] sm:$0xff] %v330
        %p332 = scmp.eq.s32.totalorder %s29, 0
        // Predicated region
        $region33: #{tpu_custom_call.1} parent=27 // pred_check
          %p333 = pneg %p332
        $region34: #{tpu_custom_call.1} parent=27 // pred_check_branch
          %335 = sbr.rel (%p333) target = $region36
        $region35: #{tpu_custom_call.1} parent=27 // pred_region
          %vm336 = vcmask 64512
          %337 = vst.msk [vmem:[#allocation2] sm:$0xff] %vm336, 0.0
          %vm338 = vcmask 7168
          %339 = vst.msk [vmem:[#allocation3] sm:$0xff] %vm338, 0.0
        $region36: #{tpu_custom_call.1} parent=27 // pred_fallthru
          _
        %v340 = vld [vmem:[#allocation2] sm:$0xff]
        %341 = vmatprep.subr.mxu0 %v313
        %342 = vmatpush1.xpose.msra.mxu0 %v311
        %343 = vmatprep.subr.mxu0 0.0
        %344 = vmatpush1.xpose.msra.mxu0 0.0
        %345 = vmatprep.subr.mxu0 0.0
        %346 = vmatpush1.xpose.msra.mxu0 0.0
        %347 = vmatprep.subr.mxu0 0.0
        %348 = vmatpush1.xpose.msra.mxu0 0.0
        %349 = vmatprep.subr.mxu0 0.0
        %350 = vmatpush1.xpose.msra.mxu0 0.0
        %351 = vmatprep.subr.mxu0 0.0
        %352 = vmatpush1.xpose.msra.mxu0 0.0
        %353 = vmatprep.subr.mxu0 0.0
        %354 = vmatpush1.xpose.msra.mxu0 0.0
        %355 = vmatprep.subr.mxu0 0.0
        %356 = vmatpush1.xpose.msra.mxu0 0.0
        %357 = vmatprep.subr.mxu0 0.0
        %358 = vmatpush1.xpose.msra.mxu0 0.0
        %359 = vmatprep.subr.mxu0 0.0
        %360 = vmatpush1.xpose.msra.mxu0 0.0
        %361 = vmatprep.subr.mxu0 0.0
        %362 = vmatpush1.xpose.msra.mxu0 0.0
        %363 = vmatprep.subr.mxu0 0.0
        %364 = vmatpush1.xpose.msra.mxu0 0.0
        %365 = vmatprep.subr.mxu0 0.0
        %366 = vmatpush1.xpose.msra.mxu0 0.0
        %367 = vmatprep.subr.mxu0 0.0
        %368 = vmatpush1.xpose.msra.mxu0 0.0
        %369 = vmatprep.subr.mxu0 0.0
        %370 = vmatpush1.xpose.msra.mxu0 0.0
        %371 = vmatprep.subr.mxu0 0.0
        %372 = vmatpush1.xpose.msra.mxu0 0.0
        %373 = vmatprep.subr.mxu0 0.0
        %374 = vmatpush1.xpose.msra.mxu0 0.0
        %375 = vmatprep.subr.mxu0 0.0
        %376 = vmatpush1.xpose.msra.mxu0 0.0
        %377 = vmatprep.subr.mxu0 0.0
        %378 = vmatpush1.xpose.msra.mxu0 0.0
        %379 = vmatprep.subr.mxu0 0.0
        %380 = vmatpush1.xpose.msra.mxu0 0.0
        %381 = vmatprep.subr.mxu0 0.0
        %382 = vmatpush1.xpose.msra.mxu0 0.0
        %383 = vmatprep.subr.mxu0 0.0
        %384 = vmatpush1.xpose.msra.mxu0 0.0
        %385 = vmatprep.subr.mxu0 0.0
        %386 = vmatpush1.xpose.msra.mxu0 0.0
        %387 = vmatprep.subr.mxu0 0.0
        %388 = vmatpush1.xpose.msra.mxu0 0.0
        %389 = vmatprep.subr.mxu0 0.0
        %390 = vmatpush1.xpose.msra.mxu0 0.0
        %391 = vmatprep.subr.mxu0 0.0
        %392 = vmatpush1.xpose.msra.mxu0 0.0
        %393 = vmatprep.subr.mxu0 0.0
        %394 = vmatpush1.xpose.msra.mxu0 0.0
        %395 = vmatprep.subr.mxu0 0.0
        %396 = vmatpush1.xpose.msra.mxu0 0.0
        %397 = vmatprep.subr.mxu0 0.0
        %398 = vmatpush1.xpose.msra.mxu0 0.0
        %399 = vmatprep.subr.mxu0 0.0
        %400 = vmatpush1.xpose.msra.mxu0 0.0
        %401 = vmatprep.subr.mxu0 0.0
        %402 = vmatpush1.xpose.msra.mxu0 0.0
        %403 = vmatprep.subr.mxu0 0.0
        %404 = vmatpush1.xpose.msra.mxu0 0.0
        %405 = vmatprep.mubr.f32.mxu0 %v313
        %406 = vmatmul.mubr.f32.gmra.mrb[0].mxu0 %v311
        %v407 = vpop.f32.mrb[0].mxu0
        %v408 = vadd.f32 0.0, %v407
        %v409 = vpop.f32.mrb[0].mxu0
        %410 = vdwg.mxu0
        %v411 = vadd.f32 %v340, %v408
        %vm412 = vcmask 64512
        %413 = vst.msk [vmem:[#allocation2] sm:$0xff] %vm412, %v411
        %v414 = vld [vmem:[#allocation3] sm:$0xff]
        %v415 = vmul.f32 %v311, %v311
        %v416 = vmul.f32 %v313, %v313
        %v417 = vadd.f32 %v415, %v416
        %418 = vadd.xlane.f32.xlu0 %v417
        %v419 = vpop.xlane.xlu0 %418
        %v420 = vadd.f32 %v414, %v419
        %vm421 = vcmask 7168
        %422 = vst.msk [vmem:[#allocation3] sm:$0xff] %vm421, %v420
        // Predicated region
        $region37: #{tpu_custom_call.1} parent=27 // pred_check
          %p423 = pneg %p332
        $region38: #{tpu_custom_call.1} parent=27 // pred_check_branch
          %425 = sbr.rel (%p423) target = $region40
        $region39: #{tpu_custom_call.1} parent=27 // pred_region
          %v426 = vld [vmem:[#allocation3] sm:$0xff]
          %427 = vxpose.xlu0.b32.start [1/16] %v426, 128
          %428 = vxpose.xlu0.b32.cont [2/16] 0.0, 128
          %429 = vxpose.xlu0.b32.cont [3/16] 0.0, 128
          %430 = vxpose.xlu0.b32.cont [4/16] 0.0, 128
          %431 = vxpose.xlu0.b32.cont [5/16] 0.0, 128
          %432 = vxpose.xlu0.b32.cont [6/16] 0.0, 128
          %433 = vxpose.xlu0.b32.cont [7/16] 0.0, 128
          %434 = vxpose.xlu0.b32.cont [8/16] 0.0, 128
          %435 = vxpose.xlu0.b32.cont [9/16] 0.0, 128
          %436 = vxpose.xlu0.b32.cont [10/16] 0.0, 128
          %437 = vxpose.xlu0.b32.cont [11/16] 0.0, 128
          %438 = vxpose.xlu0.b32.cont [12/16] 0.0, 128
          %439 = vxpose.xlu0.b32.cont [13/16] 0.0, 128
          %440 = vxpose.xlu0.b32.cont [14/16] 0.0, 128
          %441 = vxpose.xlu0.b32.cont [15/16] 0.0, 128
          %442 = vxpose.xlu0.b32.end [16/16] 0.0, 128
          %v443 = vpop.trf.xlu0
          %v444 = vpop.trf.xlu0
          %v445 = vpop.trf.xlu0
          %v446 = vpop.trf.xlu0
          %v447 = vpop.trf.xlu0
          %v448 = vpop.trf.xlu0
          %v449 = vpop.trf.xlu0
          %v450 = vpop.trf.xlu0
          %v451 = vpop.trf.xlu0
          %v452 = vpop.trf.xlu0
          %v453 = vpop.trf.xlu0
          %v454 = vpop.trf.xlu0
          %v455 = vpop.trf.xlu0
          %v456 = vpop.trf.xlu0
          %v457 = vpop.trf.xlu0
          %v458 = vpop.trf.xlu0
          %460 = vset.pattern.permute.xlu0 0
          %461 = vperm.xlu0 %460, %v426
          %v462 = vpop.permute.xlu0 %461
          %v464 = vlaneseq
          %v465 = vshrl.u32 %v464, 7
          %v466 = vsub.s32 0, %v465
          %v467 = vrot.slane %v443, %v466
          %v468 = vadd.f32 %v462, %v467
          %v469 = vadd.f32 %v468, 2e-12
          %v470 = vld [vmem:[#allocation2] sm:$0xff]
          %v471 = vmul.f32 %v470, 2.0
          %v472 = vrcp.pop %v469
          %v473 = vmul.f32 %v471, %v472
          %v474 = vlaneseq
          %v475 = vshrl.u32 %v474, 7
          %v476 = vlaneseq
          %v477 = vand.u32 %v476, 127
          %vm478 = vcmp.ne.s32.totalorder %v475, %v477
          %v479 = vsel %vm478, %v473, 0.0
          %v480 = vsel %vm412, %v479, 0.0
          %481 = vadd.xlane.f32.xlu0 %v480
          %v482 = vpop.xlane.xlu0 %481
          %v483 = vrot.slane %v482, 4
          %v484 = vadd.f32 %v482, %v483
          %v485 = vrot.slane %v484, 2
          %v486 = vadd.f32 %v484, %v485
          %v487 = vrot.slane %v486, 1
          %v488 = vadd.f32 %v486, %v487
          %s489 = vtos %v488
          %v490 = vstv %s489
          %491 = vst [vmem:[%s215] sm:$0xff] %v490
        $region40: #{tpu_custom_call.1} parent=27 // pred_fallthru
          _
        %s492 = sand.u32 %s95, 1
        %s493 = scalar_lea.sflag [#allocation6], %s492
        %s494 = sand.u32 %s95, 1
        %s495 = smul.addr %s494, 8
        %s496 = scalar_lea.vmem [#allocation7], %s495
        %s497 = sand.u32 %s121, 1
        %s498 = scalar_lea.sflag [#allocation9], %s497
        %s499 = sand.u32 %s121, 1
        %s500 = smul.addr %s499, 8
        %s501 = scalar_lea.vmem [#allocation8], %s500
        // Predicated region
        $region41: #{tpu_custom_call.1} parent=27 // pred_check
          %p502 = pneg %p105
        $region42: #{tpu_custom_call.1} parent=27 // pred_check_branch
          %504 = sbr.rel (%p502) target = $region44
        $region43: #{tpu_custom_call.1} parent=27 // pred_region
          %s505 = smul.u32 2, %s29
          %s507 = ssub.s32 128, 128
          %508 = vsyncadd %s493, %s507
          %s509 = smul.addr %s28, 2
          %s510 = sadd.s32 %s505, %s509
          %s511 = smul.addr %s510, 64
          %s512 = scalar_lea.hbm %s2, %s511
          %s514 = sshll.u32 %s496, 4
          %s515 = int_to_ptr.vmem [resolvable:$true] %s514
          %517 = dma.vmem_to_hbm [thread:$0]  %s515, 128, %s512, %s493
        $region44: #{tpu_custom_call.1} parent=27 // pred_fallthru
          _
        // Predicated region
        $region45: #{tpu_custom_call.1} parent=27 // pred_check
          %p518 = pneg %p131
        $region46: #{tpu_custom_call.1} parent=27 // pred_check_branch
          %520 = sbr.rel (%p518) target = $region48
        $region47: #{tpu_custom_call.1} parent=27 // pred_region
          %s522 = ssub.s32 128, 128
          %523 = vsyncadd %s498, %s522
          %s524 = smul.addr %s28, 128
          %s525 = scalar_lea.hbm %s3, %s524
          %s527 = sshll.u32 %s501, 4
          %s528 = int_to_ptr.vmem [resolvable:$true] %s527
          %530 = dma.vmem_to_hbm [thread:$0]  %s528, 128, %s525, %s498
        $region48: #{tpu_custom_call.1} parent=27 // pred_fallthru
          _
      $region28: #{tpu_custom_call.1} parent=5 // pred_fallthru
        _
      %p531 = scmp.le.s32.totalorder 2, %s19
      // Predicated region
      $region49: #{tpu_custom_call.1} parent=5 // pred_check
        %p532 = pneg %p531
      $region50: #{tpu_custom_call.1} parent=5 // pred_check_branch
        %534 = sbr.rel (%p532) target = $region52
      $region51: #{tpu_custom_call.1} parent=5 // pred_region
        %s535 = ssub.s32 %s19, 2
        // Predicated region
        $region53: #{tpu_custom_call.1} parent=51 // pred_check
          %p536 = pneg %p111
        $region54: #{tpu_custom_call.1} parent=51 // pred_check_branch
          %538 = sbr.rel (%p536) target = $region56
        $region55: #{tpu_custom_call.1} parent=51 // pred_region
          %s539 = sand.u32 %s96, 1
          %s540 = scalar_lea.sflag [#allocation6], %s539
          %s541 = sand.u32 %s96, 1
          %s542 = smul.addr %s541, 8
          %s543 = scalar_lea.vmem [#allocation7], %s542
          %544 = dma.done %s540, 128
        $region56: #{tpu_custom_call.1} parent=51 // pred_fallthru
          _
        // Predicated region
        $region57: #{tpu_custom_call.1} parent=51 // pred_check
          %p545 = pneg %p137
        $region58: #{tpu_custom_call.1} parent=51 // pred_check_branch
          %547 = sbr.rel (%p545) target = $region60
        $region59: #{tpu_custom_call.1} parent=51 // pred_region
          %s548 = sand.u32 %s122, 1
          %s549 = scalar_lea.sflag [#allocation9], %s548
          %s550 = sand.u32 %s122, 1
          %s551 = smul.addr %s550, 8
          %s552 = scalar_lea.vmem [#allocation8], %s551
          %553 = dma.done %s549, 128
        $region60: #{tpu_custom_call.1} parent=51 // pred_fallthru
          _
      $region52: #{tpu_custom_call.1} parent=5 // pred_fallthru
        _
    $region6: #{tpu_custom_call.1} parent=1 // loop_footer
      %s23 = sadd.s32 1, %s19
    $region7: #{tpu_custom_call.1} parent=1 // loop_footer_branch
      %18 = sbr.rel target = $region3
    $region8: #{tpu_custom_call.1} parent=1 // loop_exit
      _
    %554 = vsyncpa [#allocation5], 1
    %s555 = scalar_lea.sflag [#allocation5], 1
    %556 = vsyncpa %s555, 1
    %557 = vsyncpa [#allocation6], 1
    %s558 = scalar_lea.sflag [#allocation6], 1
    %559 = vsyncpa %s558, 1
    %560 = vsyncpa [#allocation9], 1
    %s561 = scalar_lea.sflag [#allocation9], 1
    %562 = vsyncpa %s561, 1

</llo_original>
